<compile_context>
chip_gen: v7x
topology: tpu7x:2x2x1
jax: 0.10.0
libtpu: 0.0.40
codegen_flags: <defaults>
</compile_context>

<pallas_src>
import jax
import jax.numpy as jnp
from jax.experimental import pallas as pl
from jax.experimental.pallas import tpu as pltpu

_LANE = 128     # vreg lane width
_SUBLANE = 8    # vreg sublane count (f32)


def _intent_head_kernel(h_ref, a_ref, w_ref, b_ref, o_ref):
    # Elementwise add of decoder hidden + attention context (VPU).
    x = h_ref[...] + a_ref[...]
    # (TB, H) @ (H, I_pad) on the MXU with f32 accumulation.
    y = jnp.dot(x, w_ref[...], preferred_element_type=jnp.float32)
    # Bias broadcast over the batch tile; lane-dense store.
    o_ref[...] = (y + b_ref[...]).astype(o_ref.dtype)


def _round_up(x, m):
    return ((x + m - 1) // m) * m


def decoder_intent(hidden, attn_hidden, weight_t, bias, *, max_tile_b=128):
    """hidden, attn_hidden: (B, H); weight_t: (H, I); bias: (1, I) -> (B, I)."""
    B, H = hidden.shape
    H2, I = weight_t.shape
    assert H == H2
    assert attn_hidden.shape == (B, H)
    assert bias.shape == (1, I)

    # --- pad to TPU-friendly shapes (wrapper-side; sliced back at the end) ---
    I_pad = _round_up(I, _LANE)                       # lane-dense output
    if B >= max_tile_b:
        tile_b = max_tile_b                           # 128-row M tiles
    else:
        tile_b = _round_up(B, _SUBLANE)               # small-batch path
    B_pad = _round_up(B, tile_b)

    hidden_p = jnp.pad(hidden, ((0, B_pad - B), (0, 0)))
    attn_p = jnp.pad(attn_hidden, ((0, B_pad - B), (0, 0)))
    w_p = jnp.pad(weight_t, ((0, 0), (0, I_pad - I)))
    b_p = jnp.pad(bias, ((0, 0), (0, I_pad - I)))

    grid = (B_pad // tile_b,)

    # Advisory cost for XLA's scheduler (real work, unpadded dims).
    itemsize = jnp.dtype(hidden.dtype).itemsize
    cost = pl.CostEstimate(
        flops=2 * B * H * I,
        transcendentals=0,
        bytes_accessed=(2 * B * H + H * I + I + B * I) * itemsize,
    )

    out_p = pl.pallas_call(
        _intent_head_kernel,
        out_shape=jax.ShapeDtypeStruct((B_pad, I_pad), jnp.float32),
        grid_spec=pltpu.PrefetchScalarGridSpec(
            num_scalar_prefetch=0,
            grid=grid,
            in_specs=[
                # batch-tiled activations
                pl.BlockSpec((tile_b, H), lambda i: (i, 0)),
                pl.BlockSpec((tile_b, H), lambda i: (i, 0)),
                # weight / bias: constant block index -> resident in VMEM
                pl.BlockSpec((H, I_pad), lambda i: (0, 0)),
                pl.BlockSpec((1, I_pad), lambda i: (0, 0)),
            ],
            out_specs=pl.BlockSpec((tile_b, I_pad), lambda i: (i, 0)),
        ),
        compiler_params=pltpu.CompilerParams(
            # batch tiles are independent -> megacore sharding on v7x
            dimension_semantics=("parallel",),
        ),
        cost_estimate=cost,
    )(hidden_p, attn_p, w_p, b_p)

    return out_p[:B, :I]


def decoder_intent_ref(hidden, attn_hidden, weight_t, bias):
    # pure-JAX reference (mirrors the PyTorch forward)
    out = hidden + attn_hidden
    return out @ weight_t + bias


if __name__ == "__main__":
    # Small shapes consistent with the module: batch=2, hidden=32, intent=8
    B, H, I = 2, 32, 8

    key = jax.random.PRNGKey(0)
    k_h, k_a, k_w, k_b = jax.random.split(key, 4)

    hidden = jax.random.normal(k_h, (B, H), dtype=jnp.float32)
    attn_hidden = jax.random.normal(k_a, (B, H), dtype=jnp.float32)

    # Deterministic parameter init mimicking nn.Linear default:
    # U(-1/sqrt(H), 1/sqrt(H)) for both weight and bias.
    bound = 1.0 / jnp.sqrt(jnp.float32(H))
    # PyTorch weight shape is (I, H); we store it pre-transposed as (H, I).
    weight_t = jax.random.uniform(
        k_w, (H, I), dtype=jnp.float32, minval=-bound, maxval=bound
    )
    bias = jax.random.uniform(
        k_b, (1, I), dtype=jnp.float32, minval=-bound, maxval=bound
    )

    # Small-batch path (grid=(1,), tile_b=8, lane-padded output).
    out = decoder_intent(hidden, attn_hidden, weight_t, bias)
    out = jax.block_until_ready(out)
    ref = decoder_intent_ref(hidden, attn_hidden, weight_t, bias)
    assert out.shape == (B, I)
    assert jnp.allclose(out, ref, atol=1e-5, rtol=1e-5)

    # Batched path (grid>1, 128-row M tiles, "parallel" axis) — exercises the
    # configuration the review asked for when many decode steps are gathered.
    Bb = 256
    k_hb, k_ab = jax.random.split(jax.random.PRNGKey(1), 2)
    hidden_b = jax.random.normal(k_hb, (Bb, H), dtype=jnp.float32)
    attn_b = jax.random.normal(k_ab, (Bb, H), dtype=jnp.float32)
    out_b = jax.block_until_ready(
        decoder_intent(hidden_b, attn_b, weight_t, bias)
    )
    ref_b = decoder_intent_ref(hidden_b, attn_b, weight_t, bias)
    assert out_b.shape == (Bb, I)
    assert jnp.allclose(out_b, ref_b, atol=1e-5, rtol=1e-5)

    print("KERNEL_OK")
</pallas_src>

<mosaic_0001>
module attributes {stable_mosaic.version = 11 : i64} {
  func.func @_intent_head_kernel(%arg0: i32, %arg1: memref<8x32xf32, #tpu.memory_space<vmem>>, %arg2: memref<8x32xf32, #tpu.memory_space<vmem>>, %arg3: memref<32x128xf32, #tpu.memory_space<vmem>>, %arg4: memref<1x128xf32, #tpu.memory_space<vmem>>, %arg5: memref<8x128xf32, #tpu.memory_space<vmem>>) attributes {dimension_semantics = [#tpu.dimension_semantics<parallel>], iteration_bounds = array<i64: 1>, scalar_prefetch = 0 : i64, scratch_operands = 0 : i64, tpu.core_type = #tpu.core_type<tc>, window_params = [{transform_indices = @transform_0, window_bounds = array<i64: 8, 32>}, {transform_indices = @transform_1, window_bounds = array<i64: 8, 32>}, {pipeline_mode = #tpu.pipeline_mode<synchronous>, transform_indices = @transform_2, window_bounds = array<i64: 32, 128>}, {pipeline_mode = #tpu.pipeline_mode<synchronous>, transform_indices = @transform_3, window_bounds = array<i64: 1, 128>}, {transform_indices = @transform_4, window_bounds = array<i64: 8, 128>}]} {
    %c0 = arith.constant 0 : index
    %c0_0 = arith.constant 0 : index
    %0 = vector.load %arg1[%c0, %c0_0] : memref<8x32xf32, #tpu.memory_space<vmem>>, vector<8x32xf32>
    %c0_1 = arith.constant 0 : index
    %c0_2 = arith.constant 0 : index
    %1 = vector.load %arg2[%c0_1, %c0_2] : memref<8x32xf32, #tpu.memory_space<vmem>>, vector<8x32xf32>
    %2 = arith.addf %0, %1 : vector<8x32xf32>
    %c0_3 = arith.constant 0 : index
    %c0_4 = arith.constant 0 : index
    %3 = vector.load %arg3[%c0_3, %c0_4] : memref<32x128xf32, #tpu.memory_space<vmem>>, vector<32x128xf32>
    %cst = arith.constant dense<0.000000e+00> : vector<8x128xf32>
    %4 = tpu.matmul %2, %3, %cst {dimension_numbers = #tpu.dot_dimension_numbers<[1], [0], [0], [1], [0, 0, 1, 1], [], []>} : vector<8x32xf32>, vector<32x128xf32>, vector<8x128xf32> -> vector<8x128xf32>
    %c0_5 = arith.constant 0 : index
    %c0_6 = arith.constant 0 : index
    %5 = vector.load %arg4[%c0_5, %c0_6] : memref<1x128xf32, #tpu.memory_space<vmem>>, vector<1x128xf32>
    %6 = vector.broadcast %5 : vector<1x128xf32> to vector<8x128xf32>
    %7 = arith.addf %4, %6 : vector<8x128xf32>
    %c0_7 = arith.constant 0 : index
    %c0_8 = arith.constant 0 : index
    %8 = vector.load %arg5[%c0_7, %c0_8] : memref<8x128xf32, #tpu.memory_space<vmem>>, vector<8x128xf32>
    tpu.vector_store %arg5[%c0_7, %c0_8], %7 {strides = array<i32>} : memref<8x128xf32, #tpu.memory_space<vmem>>, vector<8x128xf32>,
    return
  }
  func.func @transform_0(%arg0: i32) -> (i32, i32) {
    %c0_i32 = arith.constant 0 : i32
    %c0_i32_0 = arith.constant 0 : i32
    return %arg0, %c0_i32 : i32, i32
  }
  func.func @transform_1(%arg0: i32) -> (i32, i32) {
    %c0_i32 = arith.constant 0 : i32
    %c0_i32_0 = arith.constant 0 : i32
    return %arg0, %c0_i32 : i32, i32
  }
  func.func @transform_2(%arg0: i32) -> (i32, i32) {
    %c0_i32 = arith.constant 0 : i32
    %c0_i32_0 = arith.constant 0 : i32
    %c0_i32_1 = arith.constant 0 : i32
    return %c0_i32, %c0_i32_0 : i32, i32
  }
  func.func @transform_3(%arg0: i32) -> (i32, i32) {
    %c0_i32 = arith.constant 0 : i32
    %c0_i32_0 = arith.constant 0 : i32
    %c0_i32_1 = arith.constant 0 : i32
    return %c0_i32, %c0_i32_0 : i32, i32
  }
  func.func @transform_4(%arg0: i32) -> (i32, i32) {
    %c0_i32 = arith.constant 0 : i32
    %c0_i32_0 = arith.constant 0 : i32
    return %arg0, %c0_i32 : i32, i32
  }
}

</mosaic_0001>

<llo_original>
// kernel: tpu_custom_call.1
$region0: #{tpu_custom_call.1}
  #allocation0 [shape = 'u32[]', space=smem, size = 0x4, offset = 0x4, fixed_abs, tag = 'smem constant byte address 0x4 - core index']
  #allocation1 [shape = 'u32[144,128]{1,0:T(1,128)}', space=vmem, size = 0x12000, scoped, tag = 'internal scratch']
  %s0 = inlined_call_operand.hbm [shape: f32[8,32], index: 0, kind: input, shape index: {}]
  %s1 = inlined_call_operand.hbm [shape: f32[8,32], index: 1, kind: input, shape index: {}]
  %s2 = inlined_call_operand.hbm [shape: f32[32,128], index: 2, kind: input, shape index: {}]
  %s3 = inlined_call_operand.vmem [shape: f32[1,128], index: 3, kind: input, shape index: {}]
  %s4 = inlined_call_operand.hbm [shape: f32[8,128], index: 4, kind: output, shape index: {}]
  %s5 = sld [smem:[#allocation0]]
  $region38: #{tpu_custom_call.1} parent=0
    _
  %s7 = ssub.s32 1, %s5
  %s8 = scalar_select 0, %s7, %s5
  $region1: #{tpu_custom_call.1} parent=0
    #allocation2 [shape = 'u8[4096]{0}', space=vmem, size = 0x1000, scoped, tag = 'input window, operand 0, single buffered']
    #allocation3 [shape = 's32[1]{0}', space=sflag, size = 0x4, scoped, tag = 'scoped memory for tpu_custom_call.1']
    #allocation4 [shape = 's32[1]{0}', space=sflag, size = 0x4, scoped, tag = 'scoped memory for tpu_custom_call.1']
    #allocation5 [shape = 'u8[4096]{0}', space=vmem, size = 0x1000, scoped, tag = 'input window, operand 1, single buffered']
    #allocation6 [shape = 's32[1]{0}', space=sflag, size = 0x4, scoped, tag = 'scoped memory for tpu_custom_call.1']
    #allocation7 [shape = 'u8[16384]{0}', space=vmem, size = 0x4000, scoped, tag = 'input window, operand 2, single buffered']
    #allocation8 [shape = 'u8[4096]{0}', space=vmem, size = 0x1000, scoped, tag = 'output window, operand 0, single buffered']
    %9 = vsyncpa [#allocation3], 0
    %10 = vsyncpa [#allocation6], 0
    %11 = vsyncpa [#allocation4], 0
    // Predicated region
    $region2: #{tpu_custom_call.1} parent=1 // pred_check
      _
    $region3: #{tpu_custom_call.1} parent=1 // pred_check_branch
      %13 = sbr.rel (0) target = $region5
    $region4: #{tpu_custom_call.1} parent=1 // pred_region
      %s15 = ssub.s32 128, 128
      %16 = vsyncadd [#allocation3], %s15
      %s18 = sshll.u32 [#allocation2], 4
      %s19 = int_to_ptr.vmem [resolvable:$true] %s18
      %21 = dma.hbm_to_vmem [thread:$0]  %s0, 128, %s19, [#allocation3]
    $region5: #{tpu_custom_call.1} parent=1 // pred_fallthru
      _
    // Predicated region
    $region6: #{tpu_custom_call.1} parent=1 // pred_check
      _
    $region7: #{tpu_custom_call.1} parent=1 // pred_check_branch
      %23 = sbr.rel (0) target = $region9
    $region8: #{tpu_custom_call.1} parent=1 // pred_region
      %s25 = ssub.s32 128, 128
      %26 = vsyncadd [#allocation6], %s25
      %s28 = sshll.u32 [#allocation5], 4
      %s29 = int_to_ptr.vmem [resolvable:$true] %s28
      %31 = dma.hbm_to_vmem [thread:$0]  %s1, 128, %s29, [#allocation6]
    $region9: #{tpu_custom_call.1} parent=1 // pred_fallthru
      _
    // Predicated region
    $region10: #{tpu_custom_call.1} parent=1 // pred_check
      _
    $region11: #{tpu_custom_call.1} parent=1 // pred_check_branch
      %33 = sbr.rel (0) target = $region13
    $region12: #{tpu_custom_call.1} parent=1 // pred_region
      %s35 = ssub.s32 512, 512
      %36 = vsyncadd [#allocation6], %s35
      %s37 = sshll.u32 [#allocation7], 4
      %s38 = int_to_ptr.vmem [resolvable:$true] %s37
      %43 = dma.hbm_to_vmem [thread:$0]  %s2, 512, %s38, [#allocation6], 128, 128, 8
    $region13: #{tpu_custom_call.1} parent=1 // pred_fallthru
      _
    // Predicated region
    $region14: #{tpu_custom_call.1} parent=1 // pred_check
      _
    $region15: #{tpu_custom_call.1} parent=1 // pred_check_branch
      %45 = sbr.rel (0) target = $region17
    $region16: #{tpu_custom_call.1} parent=1 // pred_region
      _
    $region17: #{tpu_custom_call.1} parent=1 // pred_fallthru
      _
    // Predicated region
    $region18: #{tpu_custom_call.1} parent=1 // pred_check
      _
    $region19: #{tpu_custom_call.1} parent=1 // pred_check_branch
      %47 = sbr.rel (0) target = $region21
    $region20: #{tpu_custom_call.1} parent=1 // pred_region
      %48 = dma.done [#allocation3], 128
    $region21: #{tpu_custom_call.1} parent=1 // pred_fallthru
      _
    // Predicated region
    $region22: #{tpu_custom_call.1} parent=1 // pred_check
      _
    $region23: #{tpu_custom_call.1} parent=1 // pred_check_branch
      %50 = sbr.rel (0) target = $region25
    $region24: #{tpu_custom_call.1} parent=1 // pred_region
      %51 = dma.done [#allocation6], 128
    $region25: #{tpu_custom_call.1} parent=1 // pred_fallthru
      _
    // Predicated region
    $region26: #{tpu_custom_call.1} parent=1 // pred_check
      _
    $region27: #{tpu_custom_call.1} parent=1 // pred_check_branch
      %53 = sbr.rel (0) target = $region29
    $region28: #{tpu_custom_call.1} parent=1 // pred_region
      %54 = dma.done [#allocation6], 512
    $region29: #{tpu_custom_call.1} parent=1 // pred_fallthru
      _
    %v55 = vld [vmem:[#allocation2] sm:$0xff]
    %v56 = vld [vmem:[#allocation5] sm:$0xff]
    %v57 = vadd.f32 %v55, %v56
    %v58 = vld [vmem:[#allocation7] sm:$0xff]
    %v59 = vld [vmem:[#allocation7 + $0x8] sm:$0xff]
    %v60 = vld [vmem:[#allocation7 + $0x10] sm:$0xff]
    %v61 = vld [vmem:[#allocation7 + $0x18] sm:$0xff]
    %v62 = vld [vmem:[%s3] sm:$0x1]
    %v64 = vlaneseq
    %v65 = vshrl.u32 %v64, 7
    %v66 = vsub.s32 0, %v65
    %v67 = vrot.slane %v62, %v66
    %vm69 = vcmask 261120
    %v71 = vsel %vm69, %v57, 0
    %73 = vmatprep.subr.mxu0 0.0
    %74 = vmatpush1.msra.mxu0 %v58
    %75 = vmatprep.subr.mxu0 0.0
    %76 = vmatpush1.msra.mxu0 %v59
    %77 = vmatprep.subr.mxu0 0.0
    %78 = vmatpush1.msra.mxu0 %v60
    %79 = vmatprep.subr.mxu0 0.0
    %80 = vmatpush1.msra.mxu0 %v61
    %81 = vmatprep.subr.mxu0 0.0
    %82 = vmatpush1.msra.mxu0 0.0
    %83 = vmatprep.subr.mxu0 0.0
    %84 = vmatpush1.msra.mxu0 0.0
    %85 = vmatprep.subr.mxu0 0.0
    %86 = vmatpush1.msra.mxu0 0.0
    %87 = vmatprep.subr.mxu0 0.0
    %88 = vmatpush1.msra.mxu0 0.0
    %89 = vmatprep.subr.mxu0 0.0
    %90 = vmatpush1.msra.mxu0 0.0
    %91 = vmatprep.subr.mxu0 0.0
    %92 = vmatpush1.msra.mxu0 0.0
    %93 = vmatprep.subr.mxu0 0.0
    %94 = vmatpush1.msra.mxu0 0.0
    %95 = vmatprep.subr.mxu0 0.0
    %96 = vmatpush1.msra.mxu0 0.0
    %97 = vmatprep.subr.mxu0 0.0
    %98 = vmatpush1.msra.mxu0 0.0
    %99 = vmatprep.subr.mxu0 0.0
    %100 = vmatpush1.msra.mxu0 0.0
    %101 = vmatprep.subr.mxu0 0.0
    %102 = vmatpush1.msra.mxu0 0.0
    %103 = vmatprep.subr.mxu0 0.0
    %104 = vmatpush1.msra.mxu0 0.0
    %105 = vmatprep.subr.mxu0 0.0
    %106 = vmatpush1.msra.mxu0 0.0
    %107 = vmatprep.subr.mxu0 0.0
    %108 = vmatpush1.msra.mxu0 0.0
    %109 = vmatprep.subr.mxu0 0.0
    %110 = vmatpush1.msra.mxu0 0.0
    %111 = vmatprep.subr.mxu0 0.0
    %112 = vmatpush1.msra.mxu0 0.0
    %113 = vmatprep.subr.mxu0 0.0
    %114 = vmatpush1.msra.mxu0 0.0
    %115 = vmatprep.subr.mxu0 0.0
    %116 = vmatpush1.msra.mxu0 0.0
    %117 = vmatprep.subr.mxu0 0.0
    %118 = vmatpush1.msra.mxu0 0.0
    %119 = vmatprep.subr.mxu0 0.0
    %120 = vmatpush1.msra.mxu0 0.0
    %121 = vmatprep.subr.mxu0 0.0
    %122 = vmatpush1.msra.mxu0 0.0
    %123 = vmatprep.subr.mxu0 0.0
    %124 = vmatpush1.msra.mxu0 0.0
    %125 = vmatprep.subr.mxu0 0.0
    %126 = vmatpush1.msra.mxu0 0.0
    %127 = vmatprep.subr.mxu0 0.0
    %128 = vmatpush1.msra.mxu0 0.0
    %129 = vmatprep.subr.mxu0 0.0
    %130 = vmatpush1.msra.mxu0 0.0
    %131 = vmatprep.subr.mxu0 0.0
    %132 = vmatpush1.msra.mxu0 0.0
    %133 = vmatprep.subr.mxu0 0.0
    %134 = vmatpush1.msra.mxu0 0.0
    %135 = vmatprep.subr.mxu0 0.0
    %136 = vmatpush1.msra.mxu0 0.0
    %137 = vmatprep.mubr.f32.mxu0 0.0
    %138 = vmatmul.mubr.f32.gmra.mrb[0].mxu0 %v71
    %v139 = vpop.f32.mrb[0].mxu0
    %v140 = vadd.f32 %v67, %v139
    %v141 = vpop.f32.mrb[0].mxu0
    %142 = vdwg.mxu0
    %143 = vst [vmem:[#allocation8] sm:$0xff] %v140
    // Predicated region
    $region30: #{tpu_custom_call.1} parent=1 // pred_check
      _
    $region31: #{tpu_custom_call.1} parent=1 // pred_check_branch
      %145 = sbr.rel (0) target = $region33
    $region32: #{tpu_custom_call.1} parent=1 // pred_region
      %s147 = ssub.s32 128, 128
      %148 = vsyncadd [#allocation4], %s147
      %s150 = sshll.u32 [#allocation8], 4
      %s151 = int_to_ptr.vmem [resolvable:$true] %s150
      %153 = dma.vmem_to_hbm [thread:$0]  %s151, 128, %s4, [#allocation4]
    $region33: #{tpu_custom_call.1} parent=1 // pred_fallthru
      _
    // Predicated region
    $region34: #{tpu_custom_call.1} parent=1 // pred_check
      _
    $region35: #{tpu_custom_call.1} parent=1 // pred_check_branch
      %155 = sbr.rel (0) target = $region37
    $region36: #{tpu_custom_call.1} parent=1 // pred_region
      %156 = dma.done [#allocation4], 128
    $region37: #{tpu_custom_call.1} parent=1 // pred_fallthru
      _
    %157 = vsyncpa [#allocation3], 1
    %158 = vsyncpa [#allocation6], 1
    %159 = vsyncpa [#allocation4], 1

</llo_original>
